<compile_context>
chip_gen: v6e
topology: v6e:2x2x1
jax: 0.10.0
libtpu: 0.0.40
codegen_flags: <defaults>
</compile_context>

<pallas_src>
import functools

import jax
import jax.numpy as jnp
from jax.experimental import pallas as pl
from jax.experimental.pallas import tpu as pltpu


def _pos_embed_kernel(col_ref, row_ref, out_ref, *, h, w, f, bc):
    # col_ref: (n_col, F) full col_embed table (constant index_map -> VMEM resident)
    # row_ref: (n_row, F) full row_embed table
    # out_ref: (bc, 2F, H*W) channel-major, lane-dense output block
    hw = h * w

    # Embedding lookup of arange(w)/arange(h) == static row slices of the
    # tables; one small XLU transpose each puts the feature dim on sublanes
    # (channel-major output layout).  These are the only XLU ops per step.
    col_t = col_ref[:w, :].T.astype(out_ref.dtype)   # (F, W): col_t[c, x] = col_embed[x, c]
    row_t = row_ref[:h, :].T.astype(out_ref.dtype)   # (F, H): row_t[c, y] = row_embed[y, c]

    # VPU-exact slab construction: per-row direct stores (exact copies of the
    # table entries, a handful of live vregs, no (F, H*W) temporaries).
    #   out[0, c,     y*W + x] = col_embed[x, c]
    #   out[0, F + c, y*W + x] = row_embed[y, c]
    for y in range(h):                                # static unroll, h <= 50
        sl = pl.ds(y * w, w)
        out_ref[0, :f, sl] = col_t
        out_ref[0, f:, sl] = jnp.broadcast_to(row_t[:, y:y + 1], (f, w))

    # Replicate the slab over the remaining batch elements of this block with
    # dense, lane-chunked VMEM copies (bounded live set).  The HBM writeback
    # is still one dense (bc, 2F, H*W) DMA handled by the pipeline.
    lane_chunk = min(hw, 512)
    for b in range(1, bc):                            # static unroll, bc <= 8
        for c0 in range(0, hw, lane_chunk):
            cw = min(lane_chunk, hw - c0)
            sl = pl.ds(c0, cw)
            out_ref[b, :, sl] = out_ref[0, :, sl]


def position_embedding_learned(x, row_weight, col_weight):
    """x: (B, C, H, W) NCHW. Returns pos: (B, 2*F, H, W), same as PyTorch."""
    B = int(x.shape[0])
    H, W = int(x.shape[-2]), int(x.shape[-1])
    n_row, F = row_weight.shape
    n_col, Fc = col_weight.shape
    if Fc != F:
        raise ValueError("row_embed / col_embed feature dims must match")
    if H > n_row or W > n_col:
        raise ValueError(
            f"H={H}, W={W} exceed embedding table sizes ({n_row}, {n_col})")

    out_dtype = jnp.result_type(row_weight.dtype, col_weight.dtype)
    HW = H * W
    itemsize = jnp.dtype(out_dtype).itemsize

    # Batch-chunk size: amortize the per-step slab build and grid-step
    # overhead while keeping the double-buffered output block well inside the
    # most conservative (v5e, 16 MiB) scoped-VMEM default.
    slab_bytes = 2 * F * HW * itemsize                    # one batch element
    vmem_budget = 12 * 1024 * 1024
    bc_cap = max(1, vmem_budget // (2 * slab_bytes))      # 2x: double buffering
    bc_cap = int(min(bc_cap, 8, B))
    bc = max(d for d in range(1, bc_cap + 1) if B % d == 0)

    kernel = functools.partial(_pos_embed_kernel, h=H, w=W, f=F, bc=bc)

    pos_flat = pl.pallas_call(
        kernel,
        out_shape=jax.ShapeDtypeStruct((B, 2 * F, HW), out_dtype),
        grid=(B // bc,),
        in_specs=[
            # Full tables, constant block index -> DMA'd once, stay resident.
            pl.BlockSpec((n_col, F), lambda g: (0, 0)),
            pl.BlockSpec((n_row, F), lambda g: (0, 0)),
        ],
        # One lane-dense (bc, 2F, H*W) block per grid step (no cross-step
        # state, so "parallel" is safe on v7x's two TensorCores).
        out_specs=pl.BlockSpec((bc, 2 * F, HW), lambda g: (g, 0, 0)),
        compiler_params=pltpu.CompilerParams(
            dimension_semantics=("parallel",)),
        cost_estimate=pl.CostEstimate(
            flops=0,
            transcendentals=0,
            bytes_accessed=(B * 2 * F * HW + (n_col + n_row) * F) * itemsize),
    )(col_weight, row_weight)

    # Free (metadata-only) reshape to the PyTorch NCHW output layout.
    return pos_flat.reshape(B, 2 * F, H, W)


if __name__ == "__main__":
    key = jax.random.PRNGKey(0)
    k_row, k_col, k_x = jax.random.split(key, 3)

    num_pos_feats = 32
    B, C, H, W = 2, 4, 16, 16

    # nn.Embedding(50, num_pos_feats) weights, nn.init.uniform_ -> U[0, 1)
    row_weight = jax.random.uniform(k_row, (50, num_pos_feats), dtype=jnp.float32)
    col_weight = jax.random.uniform(k_col, (50, num_pos_feats), dtype=jnp.float32)

    x = jax.random.normal(k_x, (B, C, H, W), dtype=jnp.float32)

    pos = jax.block_until_ready(
        position_embedding_learned(x, row_weight, col_weight))

    # Pure-JAX reference mirroring the PyTorch forward.
    x_emb = col_weight[:W]   # col_embed(arange(W))
    y_emb = row_weight[:H]   # row_embed(arange(H))
    ref_hwc = jnp.concatenate(
        [
            jnp.broadcast_to(x_emb[None, :, :], (H, W, num_pos_feats)),
            jnp.broadcast_to(y_emb[:, None, :], (H, W, num_pos_feats)),
        ],
        axis=-1,
    )
    ref = jnp.broadcast_to(
        jnp.transpose(ref_hwc, (2, 0, 1))[None], (B, 2 * num_pos_feats, H, W)
    )

    assert pos.shape == (B, 2 * num_pos_feats, H, W), pos.shape
    assert pos.dtype == jnp.float32
    assert jnp.array_equal(pos, ref), "mismatch vs reference"
    print("KERNEL_OK")
</pallas_src>

<mosaic_0001>
module attributes {stable_mosaic.version = 11 : i64} {
  func.func @_pos_embed_kernel(%arg0: i32, %arg1: memref<50x32xf32, #tpu.memory_space<vmem>>, %arg2: memref<50x32xf32, #tpu.memory_space<vmem>>, %arg3: memref<2x64x256xf32, #tpu.memory_space<vmem>>) attributes {dimension_semantics = [#tpu.dimension_semantics<parallel>], iteration_bounds = array<i64: 1>, scalar_prefetch = 0 : i64, scratch_operands = 0 : i64, tpu.core_type = #tpu.core_type<tc>, window_params = [{pipeline_mode = #tpu.pipeline_mode<synchronous>, transform_indices = @transform_0, window_bounds = array<i64: 50, 32>}, {pipeline_mode = #tpu.pipeline_mode<synchronous>, transform_indices = @transform_1, window_bounds = array<i64: 50, 32>}, {transform_indices = @transform_2, window_bounds = array<i64: 2, 64, 256>}]} {
    %c0 = arith.constant 0 : index
    %c0_0 = arith.constant 0 : index
    %0 = vector.load %arg1[%c0, %c0_0] : memref<50x32xf32, #tpu.memory_space<vmem>>, vector<16x32xf32>
    %1 = tpu.transpose %0, [1, 0] : vector<16x32xf32> -> vector<32x16xf32>
    %c0_1 = arith.constant 0 : index
    %c0_2 = arith.constant 0 : index
    %2 = vector.load %arg2[%c0_1, %c0_2] : memref<50x32xf32, #tpu.memory_space<vmem>>, vector<16x32xf32>
    %3 = tpu.transpose %2, [1, 0] : vector<16x32xf32> -> vector<32x16xf32>
    %c0_3 = arith.constant 0 : index
    %c0_4 = arith.constant 0 : index
    %c0_5 = arith.constant 0 : index
    %4 = vector.load %arg3[%c0_3, %c0_4, %c0_5] : memref<2x64x256xf32, #tpu.memory_space<vmem>>, vector<1x32x16xf32>
    %5 = vector.shape_cast %4 : vector<1x32x16xf32> to vector<32x16xf32>
    %6 = vector.shape_cast %1 : vector<32x16xf32> to vector<1x32x16xf32>
    tpu.vector_store %arg3[%c0_3, %c0_4, %c0_5], %6 {strides = array<i32>} : memref<2x64x256xf32, #tpu.memory_space<vmem>>, vector<1x32x16xf32>,
    %7 = vector.extract_strided_slice %3 {offsets = [0, 0], sizes = [32, 1], strides = [1, 1]} : vector<32x16xf32> to vector<32x1xf32>
    %8 = vector.shape_cast %7 : vector<32x1xf32> to vector<32x1xf32>
    %9 = vector.broadcast %8 : vector<32x1xf32> to vector<32x16xf32>
    %c0_6 = arith.constant 0 : index
    %c32 = arith.constant 32 : index
    %c0_7 = arith.constant 0 : index
    %10 = vector.load %arg3[%c0_6, %c32, %c0_7] : memref<2x64x256xf32, #tpu.memory_space<vmem>>, vector<1x32x16xf32>
    %11 = vector.shape_cast %10 : vector<1x32x16xf32> to vector<32x16xf32>
    %12 = vector.shape_cast %9 : vector<32x16xf32> to vector<1x32x16xf32>
    tpu.vector_store %arg3[%c0_6, %c32, %c0_7], %12 {strides = array<i32>} : memref<2x64x256xf32, #tpu.memory_space<vmem>>, vector<1x32x16xf32>,
    %c0_8 = arith.constant 0 : index
    %c0_9 = arith.constant 0 : index
    %c16 = arith.constant 16 : index
    %13 = vector.load %arg3[%c0_8, %c0_9, %c16] : memref<2x64x256xf32, #tpu.memory_space<vmem>>, vector<1x32x16xf32>
    %14 = vector.shape_cast %13 : vector<1x32x16xf32> to vector<32x16xf32>
    %15 = vector.shape_cast %1 : vector<32x16xf32> to vector<1x32x16xf32>
    tpu.vector_store %arg3[%c0_8, %c0_9, %c16], %15 {strides = array<i32>} : memref<2x64x256xf32, #tpu.memory_space<vmem>>, vector<1x32x16xf32>,
    %16 = vector.extract_strided_slice %3 {offsets = [0, 1], sizes = [32, 1], strides = [1, 1]} : vector<32x16xf32> to vector<32x1xf32>
    %17 = vector.shape_cast %16 : vector<32x1xf32> to vector<32x1xf32>
    %18 = vector.broadcast %17 : vector<32x1xf32> to vector<32x16xf32>
    %c0_10 = arith.constant 0 : index
    %c32_11 = arith.constant 32 : index
    %c16_12 = arith.constant 16 : index
    %19 = vector.load %arg3[%c0_10, %c32_11, %c16_12] : memref<2x64x256xf32, #tpu.memory_space<vmem>>, vector<1x32x16xf32>
    %20 = vector.shape_cast %19 : vector<1x32x16xf32> to vector<32x16xf32>
    %21 = vector.shape_cast %18 : vector<32x16xf32> to vector<1x32x16xf32>
    tpu.vector_store %arg3[%c0_10, %c32_11, %c16_12], %21 {strides = array<i32>} : memref<2x64x256xf32, #tpu.memory_space<vmem>>, vector<1x32x16xf32>,
    %c0_13 = arith.constant 0 : index
    %c0_14 = arith.constant 0 : index
    %c32_15 = arith.constant 32 : index
    %22 = vector.load %arg3[%c0_13, %c0_14, %c32_15] : memref<2x64x256xf32, #tpu.memory_space<vmem>>, vector<1x32x16xf32>
    %23 = vector.shape_cast %22 : vector<1x32x16xf32> to vector<32x16xf32>
    %24 = vector.shape_cast %1 : vector<32x16xf32> to vector<1x32x16xf32>
    tpu.vector_store %arg3[%c0_13, %c0_14, %c32_15], %24 {strides = array<i32>} : memref<2x64x256xf32, #tpu.memory_space<vmem>>, vector<1x32x16xf32>,
    %25 = vector.extract_strided_slice %3 {offsets = [0, 2], sizes = [32, 1], strides = [1, 1]} : vector<32x16xf32> to vector<32x1xf32>
    %26 = vector.shape_cast %25 : vector<32x1xf32> to vector<32x1xf32>
    %27 = vector.broadcast %26 : vector<32x1xf32> to vector<32x16xf32>
    %c0_16 = arith.constant 0 : index
    %c32_17 = arith.constant 32 : index
    %c32_18 = arith.constant 32 : index
    %28 = vector.load %arg3[%c0_16, %c32_17, %c32_18] : memref<2x64x256xf32, #tpu.memory_space<vmem>>, vector<1x32x16xf32>
    %29 = vector.shape_cast %28 : vector<1x32x16xf32> to vector<32x16xf32>
    %30 = vector.shape_cast %27 : vector<32x16xf32> to vector<1x32x16xf32>
    tpu.vector_store %arg3[%c0_16, %c32_17, %c32_18], %30 {strides = array<i32>} : memref<2x64x256xf32, #tpu.memory_space<vmem>>, vector<1x32x16xf32>,
    %c0_19 = arith.constant 0 : index
    %c0_20 = arith.constant 0 : index
    %c48 = arith.constant 48 : index
    %31 = vector.load %arg3[%c0_19, %c0_20, %c48] : memref<2x64x256xf32, #tpu.memory_space<vmem>>, vector<1x32x16xf32>
    %32 = vector.shape_cast %31 : vector<1x32x16xf32> to vector<32x16xf32>
    %33 = vector.shape_cast %1 : vector<32x16xf32> to vector<1x32x16xf32>
    tpu.vector_store %arg3[%c0_19, %c0_20, %c48], %33 {strides = array<i32>} : memref<2x64x256xf32, #tpu.memory_space<vmem>>, vector<1x32x16xf32>,
    %34 = vector.extract_strided_slice %3 {offsets = [0, 3], sizes = [32, 1], strides = [1, 1]} : vector<32x16xf32> to vector<32x1xf32>
    %35 = vector.shape_cast %34 : vector<32x1xf32> to vector<32x1xf32>
    %36 = vector.broadcast %35 : vector<32x1xf32> to vector<32x16xf32>
    %c0_21 = arith.constant 0 : index
    %c32_22 = arith.constant 32 : index
    %c48_23 = arith.constant 48 : index
    %37 = vector.load %arg3[%c0_21, %c32_22, %c48_23] : memref<2x64x256xf32, #tpu.memory_space<vmem>>, vector<1x32x16xf32>
    %38 = vector.shape_cast %37 : vector<1x32x16xf32> to vector<32x16xf32>
    %39 = vector.shape_cast %36 : vector<32x16xf32> to vector<1x32x16xf32>
    tpu.vector_store %arg3[%c0_21, %c32_22, %c48_23], %39 {strides = array<i32>} : memref<2x64x256xf32, #tpu.memory_space<vmem>>, vector<1x32x16xf32>,
    %c0_24 = arith.constant 0 : index
    %c0_25 = arith.constant 0 : index
    %c64 = arith.constant 64 : index
    %40 = vector.load %arg3[%c0_24, %c0_25, %c64] : memref<2x64x256xf32, #tpu.memory_space<vmem>>, vector<1x32x16xf32>
    %41 = vector.shape_cast %40 : vector<1x32x16xf32> to vector<32x16xf32>
    %42 = vector.shape_cast %1 : vector<32x16xf32> to vector<1x32x16xf32>
    tpu.vector_store %arg3[%c0_24, %c0_25, %c64], %42 {strides = array<i32>} : memref<2x64x256xf32, #tpu.memory_space<vmem>>, vector<1x32x16xf32>,
    %43 = vector.extract_strided_slice %3 {offsets = [0, 4], sizes = [32, 1], strides = [1, 1]} : vector<32x16xf32> to vector<32x1xf32>
    %44 = vector.shape_cast %43 : vector<32x1xf32> to vector<32x1xf32>
    %45 = vector.broadcast %44 : vector<32x1xf32> to vector<32x16xf32>
    %c0_26 = arith.constant 0 : index
    %c32_27 = arith.constant 32 : index
    %c64_28 = arith.constant 64 : index
    %46 = vector.load %arg3[%c0_26, %c32_27, %c64_28] : memref<2x64x256xf32, #tpu.memory_space<vmem>>, vector<1x32x16xf32>
    %47 = vector.shape_cast %46 : vector<1x32x16xf32> to vector<32x16xf32>
    %48 = vector.shape_cast %45 : vector<32x16xf32> to vector<1x32x16xf32>
    tpu.vector_store %arg3[%c0_26, %c32_27, %c64_28], %48 {strides = array<i32>} : memref<2x64x256xf32, #tpu.memory_space<vmem>>, vector<1x32x16xf32>,
    %c0_29 = arith.constant 0 : index
    %c0_30 = arith.constant 0 : index
    %c80 = arith.constant 80 : index
    %49 = vector.load %arg3[%c0_29, %c0_30, %c80] : memref<2x64x256xf32, #tpu.memory_space<vmem>>, vector<1x32x16xf32>
    %50 = vector.shape_cast %49 : vector<1x32x16xf32> to vector<32x16xf32>
    %51 = vector.shape_cast %1 : vector<32x16xf32> to vector<1x32x16xf32>
    tpu.vector_store %arg3[%c0_29, %c0_30, %c80], %51 {strides = array<i32>} : memref<2x64x256xf32, #tpu.memory_space<vmem>>, vector<1x32x16xf32>,
    %52 = vector.extract_strided_slice %3 {offsets = [0, 5], sizes = [32, 1], strides = [1, 1]} : vector<32x16xf32> to vector<32x1xf32>
    %53 = vector.shape_cast %52 : vector<32x1xf32> to vector<32x1xf32>
    %54 = vector.broadcast %53 : vector<32x1xf32> to vector<32x16xf32>
    %c0_31 = arith.constant 0 : index
    %c32_32 = arith.constant 32 : index
    %c80_33 = arith.constant 80 : index
    %55 = vector.load %arg3[%c0_31, %c32_32, %c80_33] : memref<2x64x256xf32, #tpu.memory_space<vmem>>, vector<1x32x16xf32>
    %56 = vector.shape_cast %55 : vector<1x32x16xf32> to vector<32x16xf32>
    %57 = vector.shape_cast %54 : vector<32x16xf32> to vector<1x32x16xf32>
    tpu.vector_store %arg3[%c0_31, %c32_32, %c80_33], %57 {strides = array<i32>} : memref<2x64x256xf32, #tpu.memory_space<vmem>>, vector<1x32x16xf32>,
    %c0_34 = arith.constant 0 : index
    %c0_35 = arith.constant 0 : index
    %c96 = arith.constant 96 : index
    %58 = vector.load %arg3[%c0_34, %c0_35, %c96] : memref<2x64x256xf32, #tpu.memory_space<vmem>>, vector<1x32x16xf32>
    %59 = vector.shape_cast %58 : vector<1x32x16xf32> to vector<32x16xf32>
    %60 = vector.shape_cast %1 : vector<32x16xf32> to vector<1x32x16xf32>
    tpu.vector_store %arg3[%c0_34, %c0_35, %c96], %60 {strides = array<i32>} : memref<2x64x256xf32, #tpu.memory_space<vmem>>, vector<1x32x16xf32>,
    %61 = vector.extract_strided_slice %3 {offsets = [0, 6], sizes = [32, 1], strides = [1, 1]} : vector<32x16xf32> to vector<32x1xf32>
    %62 = vector.shape_cast %61 : vector<32x1xf32> to vector<32x1xf32>
    %63 = vector.broadcast %62 : vector<32x1xf32> to vector<32x16xf32>
    %c0_36 = arith.constant 0 : index
    %c32_37 = arith.constant 32 : index
    %c96_38 = arith.constant 96 : index
    %64 = vector.load %arg3[%c0_36, %c32_37, %c96_38] : memref<2x64x256xf32, #tpu.memory_space<vmem>>, vector<1x32x16xf32>
    %65 = vector.shape_cast %64 : vector<1x32x16xf32> to vector<32x16xf32>
    %66 = vector.shape_cast %63 : vector<32x16xf32> to vector<1x32x16xf32>
    tpu.vector_store %arg3[%c0_36, %c32_37, %c96_38], %66 {strides = array<i32>} : memref<2x64x256xf32, #tpu.memory_space<vmem>>, vector<1x32x16xf32>,
    %c0_39 = arith.constant 0 : index
    %c0_40 = arith.constant 0 : index
    %c112 = arith.constant 112 : index
    %67 = vector.load %arg3[%c0_39, %c0_40, %c112] : memref<2x64x256xf32, #tpu.memory_space<vmem>>, vector<1x32x16xf32>
    %68 = vector.shape_cast %67 : vector<1x32x16xf32> to vector<32x16xf32>
    %69 = vector.shape_cast %1 : vector<32x16xf32> to vector<1x32x16xf32>
    tpu.vector_store %arg3[%c0_39, %c0_40, %c112], %69 {strides = array<i32>} : memref<2x64x256xf32, #tpu.memory_space<vmem>>, vector<1x32x16xf32>,
    %70 = vector.extract_strided_slice %3 {offsets = [0, 7], sizes = [32, 1], strides = [1, 1]} : vector<32x16xf32> to vector<32x1xf32>
    %71 = vector.shape_cast %70 : vector<32x1xf32> to vector<32x1xf32>
    %72 = vector.broadcast %71 : vector<32x1xf32> to vector<32x16xf32>
    %c0_41 = arith.constant 0 : index
    %c32_42 = arith.constant 32 : index
    %c112_43 = arith.constant 112 : index
    %73 = vector.load %arg3[%c0_41, %c32_42, %c112_43] : memref<2x64x256xf32, #tpu.memory_space<vmem>>, vector<1x32x16xf32>
    %74 = vector.shape_cast %73 : vector<1x32x16xf32> to vector<32x16xf32>
    %75 = vector.shape_cast %72 : vector<32x16xf32> to vector<1x32x16xf32>
    tpu.vector_store %arg3[%c0_41, %c32_42, %c112_43], %75 {strides = array<i32>} : memref<2x64x256xf32, #tpu.memory_space<vmem>>, vector<1x32x16xf32>,
    %c0_44 = arith.constant 0 : index
    %c0_45 = arith.constant 0 : index
    %c128 = arith.constant 128 : index
    %76 = vector.load %arg3[%c0_44, %c0_45, %c128] : memref<2x64x256xf32, #tpu.memory_space<vmem>>, vector<1x32x16xf32>
    %77 = vector.shape_cast %76 : vector<1x32x16xf32> to vector<32x16xf32>
    %78 = vector.shape_cast %1 : vector<32x16xf32> to vector<1x32x16xf32>
    tpu.vector_store %arg3[%c0_44, %c0_45, %c128], %78 {strides = array<i32>} : memref<2x64x256xf32, #tpu.memory_space<vmem>>, vector<1x32x16xf32>,
    %79 = vector.extract_strided_slice %3 {offsets = [0, 8], sizes = [32, 1], strides = [1, 1]} : vector<32x16xf32> to vector<32x1xf32>
    %80 = vector.shape_cast %79 : vector<32x1xf32> to vector<32x1xf32>
    %81 = vector.broadcast %80 : vector<32x1xf32> to vector<32x16xf32>
    %c0_46 = arith.constant 0 : index
    %c32_47 = arith.constant 32 : index
    %c128_48 = arith.constant 128 : index
    %82 = vector.load %arg3[%c0_46, %c32_47, %c128_48] : memref<2x64x256xf32, #tpu.memory_space<vmem>>, vector<1x32x16xf32>
    %83 = vector.shape_cast %82 : vector<1x32x16xf32> to vector<32x16xf32>
    %84 = vector.shape_cast %81 : vector<32x16xf32> to vector<1x32x16xf32>
    tpu.vector_store %arg3[%c0_46, %c32_47, %c128_48], %84 {strides = array<i32>} : memref<2x64x256xf32, #tpu.memory_space<vmem>>, vector<1x32x16xf32>,
    %c0_49 = arith.constant 0 : index
    %c0_50 = arith.constant 0 : index
    %c144 = arith.constant 144 : index
    %85 = vector.load %arg3[%c0_49, %c0_50, %c144] : memref<2x64x256xf32, #tpu.memory_space<vmem>>, vector<1x32x16xf32>
    %86 = vector.shape_cast %85 : vector<1x32x16xf32> to vector<32x16xf32>
    %87 = vector.shape_cast %1 : vector<32x16xf32> to vector<1x32x16xf32>
    tpu.vector_store %arg3[%c0_49, %c0_50, %c144], %87 {strides = array<i32>} : memref<2x64x256xf32, #tpu.memory_space<vmem>>, vector<1x32x16xf32>,
    %88 = vector.extract_strided_slice %3 {offsets = [0, 9], sizes = [32, 1], strides = [1, 1]} : vector<32x16xf32> to vector<32x1xf32>
    %89 = vector.shape_cast %88 : vector<32x1xf32> to vector<32x1xf32>
    %90 = vector.broadcast %89 : vector<32x1xf32> to vector<32x16xf32>
    %c0_51 = arith.constant 0 : index
    %c32_52 = arith.constant 32 : index
    %c144_53 = arith.constant 144 : index
    %91 = vector.load %arg3[%c0_51, %c32_52, %c144_53] : memref<2x64x256xf32, #tpu.memory_space<vmem>>, vector<1x32x16xf32>
    %92 = vector.shape_cast %91 : vector<1x32x16xf32> to vector<32x16xf32>
    %93 = vector.shape_cast %90 : vector<32x16xf32> to vector<1x32x16xf32>
    tpu.vector_store %arg3[%c0_51, %c32_52, %c144_53], %93 {strides = array<i32>} : memref<2x64x256xf32, #tpu.memory_space<vmem>>, vector<1x32x16xf32>,
    %c0_54 = arith.constant 0 : index
    %c0_55 = arith.constant 0 : index
    %c160 = arith.constant 160 : index
    %94 = vector.load %arg3[%c0_54, %c0_55, %c160] : memref<2x64x256xf32, #tpu.memory_space<vmem>>, vector<1x32x16xf32>
    %95 = vector.shape_cast %94 : vector<1x32x16xf32> to vector<32x16xf32>
    %96 = vector.shape_cast %1 : vector<32x16xf32> to vector<1x32x16xf32>
    tpu.vector_store %arg3[%c0_54, %c0_55, %c160], %96 {strides = array<i32>} : memref<2x64x256xf32, #tpu.memory_space<vmem>>, vector<1x32x16xf32>,
    %97 = vector.extract_strided_slice %3 {offsets = [0, 10], sizes = [32, 1], strides = [1, 1]} : vector<32x16xf32> to vector<32x1xf32>
    %98 = vector.shape_cast %97 : vector<32x1xf32> to vector<32x1xf32>
    %99 = vector.broadcast %98 : vector<32x1xf32> to vector<32x16xf32>
    %c0_56 = arith.constant 0 : index
    %c32_57 = arith.constant 32 : index
    %c160_58 = arith.constant 160 : index
    %100 = vector.load %arg3[%c0_56, %c32_57, %c160_58] : memref<2x64x256xf32, #tpu.memory_space<vmem>>, vector<1x32x16xf32>
    %101 = vector.shape_cast %100 : vector<1x32x16xf32> to vector<32x16xf32>
    %102 = vector.shape_cast %99 : vector<32x16xf32> to vector<1x32x16xf32>
    tpu.vector_store %arg3[%c0_56, %c32_57, %c160_58], %102 {strides = array<i32>} : memref<2x64x256xf32, #tpu.memory_space<vmem>>, vector<1x32x16xf32>,
    %c0_59 = arith.constant 0 : index
    %c0_60 = arith.constant 0 : index
    %c176 = arith.constant 176 : index
    %103 = vector.load %arg3[%c0_59, %c0_60, %c176] : memref<2x64x256xf32, #tpu.memory_space<vmem>>, vector<1x32x16xf32>
    %104 = vector.shape_cast %103 : vector<1x32x16xf32> to vector<32x16xf32>
    %105 = vector.shape_cast %1 : vector<32x16xf32> to vector<1x32x16xf32>
    tpu.vector_store %arg3[%c0_59, %c0_60, %c176], %105 {strides = array<i32>} : memref<2x64x256xf32, #tpu.memory_space<vmem>>, vector<1x32x16xf32>,
    %106 = vector.extract_strided_slice %3 {offsets = [0, 11], sizes = [32, 1], strides = [1, 1]} : vector<32x16xf32> to vector<32x1xf32>
    %107 = vector.shape_cast %106 : vector<32x1xf32> to vector<32x1xf32>
    %108 = vector.broadcast %107 : vector<32x1xf32> to vector<32x16xf32>
    %c0_61 = arith.constant 0 : index
    %c32_62 = arith.constant 32 : index
    %c176_63 = arith.constant 176 : index
    %109 = vector.load %arg3[%c0_61, %c32_62, %c176_63] : memref<2x64x256xf32, #tpu.memory_space<vmem>>, vector<1x32x16xf32>
    %110 = vector.shape_cast %109 : vector<1x32x16xf32> to vector<32x16xf32>
    %111 = vector.shape_cast %108 : vector<32x16xf32> to vector<1x32x16xf32>
    tpu.vector_store %arg3[%c0_61, %c32_62, %c176_63], %111 {strides = array<i32>} : memref<2x64x256xf32, #tpu.memory_space<vmem>>, vector<1x32x16xf32>,
    %c0_64 = arith.constant 0 : index
    %c0_65 = arith.constant 0 : index
    %c192 = arith.constant 192 : index
    %112 = vector.load %arg3[%c0_64, %c0_65, %c192] : memref<2x64x256xf32, #tpu.memory_space<vmem>>, vector<1x32x16xf32>
    %113 = vector.shape_cast %112 : vector<1x32x16xf32> to vector<32x16xf32>
    %114 = vector.shape_cast %1 : vector<32x16xf32> to vector<1x32x16xf32>
    tpu.vector_store %arg3[%c0_64, %c0_65, %c192], %114 {strides = array<i32>} : memref<2x64x256xf32, #tpu.memory_space<vmem>>, vector<1x32x16xf32>,
    %115 = vector.extract_strided_slice %3 {offsets = [0, 12], sizes = [32, 1], strides = [1, 1]} : vector<32x16xf32> to vector<32x1xf32>
    %116 = vector.shape_cast %115 : vector<32x1xf32> to vector<32x1xf32>
    %117 = vector.broadcast %116 : vector<32x1xf32> to vector<32x16xf32>
    %c0_66 = arith.constant 0 : index
    %c32_67 = arith.constant 32 : index
    %c192_68 = arith.constant 192 : index
    %118 = vector.load %arg3[%c0_66, %c32_67, %c192_68] : memref<2x64x256xf32, #tpu.memory_space<vmem>>, vector<1x32x16xf32>
    %119 = vector.shape_cast %118 : vector<1x32x16xf32> to vector<32x16xf32>
    %120 = vector.shape_cast %117 : vector<32x16xf32> to vector<1x32x16xf32>
    tpu.vector_store %arg3[%c0_66, %c32_67, %c192_68], %120 {strides = array<i32>} : memref<2x64x256xf32, #tpu.memory_space<vmem>>, vector<1x32x16xf32>,
    %c0_69 = arith.constant 0 : index
    %c0_70 = arith.constant 0 : index
    %c208 = arith.constant 208 : index
    %121 = vector.load %arg3[%c0_69, %c0_70, %c208] : memref<2x64x256xf32, #tpu.memory_space<vmem>>, vector<1x32x16xf32>
    %122 = vector.shape_cast %121 : vector<1x32x16xf32> to vector<32x16xf32>
    %123 = vector.shape_cast %1 : vector<32x16xf32> to vector<1x32x16xf32>
    tpu.vector_store %arg3[%c0_69, %c0_70, %c208], %123 {strides = array<i32>} : memref<2x64x256xf32, #tpu.memory_space<vmem>>, vector<1x32x16xf32>,
    %124 = vector.extract_strided_slice %3 {offsets = [0, 13], sizes = [32, 1], strides = [1, 1]} : vector<32x16xf32> to vector<32x1xf32>
    %125 = vector.shape_cast %124 : vector<32x1xf32> to vector<32x1xf32>
    %126 = vector.broadcast %125 : vector<32x1xf32> to vector<32x16xf32>
    %c0_71 = arith.constant 0 : index
    %c32_72 = arith.constant 32 : index
    %c208_73 = arith.constant 208 : index
    %127 = vector.load %arg3[%c0_71, %c32_72, %c208_73] : memref<2x64x256xf32, #tpu.memory_space<vmem>>, vector<1x32x16xf32>
    %128 = vector.shape_cast %127 : vector<1x32x16xf32> to vector<32x16xf32>
    %129 = vector.shape_cast %126 : vector<32x16xf32> to vector<1x32x16xf32>
    tpu.vector_store %arg3[%c0_71, %c32_72, %c208_73], %129 {strides = array<i32>} : memref<2x64x256xf32, #tpu.memory_space<vmem>>, vector<1x32x16xf32>,
    %c0_74 = arith.constant 0 : index
    %c0_75 = arith.constant 0 : index
    %c224 = arith.constant 224 : index
    %130 = vector.load %arg3[%c0_74, %c0_75, %c224] : memref<2x64x256xf32, #tpu.memory_space<vmem>>, vector<1x32x16xf32>
    %131 = vector.shape_cast %130 : vector<1x32x16xf32> to vector<32x16xf32>
    %132 = vector.shape_cast %1 : vector<32x16xf32> to vector<1x32x16xf32>
    tpu.vector_store %arg3[%c0_74, %c0_75, %c224], %132 {strides = array<i32>} : memref<2x64x256xf32, #tpu.memory_space<vmem>>, vector<1x32x16xf32>,
    %133 = vector.extract_strided_slice %3 {offsets = [0, 14], sizes = [32, 1], strides = [1, 1]} : vector<32x16xf32> to vector<32x1xf32>
    %134 = vector.shape_cast %133 : vector<32x1xf32> to vector<32x1xf32>
    %135 = vector.broadcast %134 : vector<32x1xf32> to vector<32x16xf32>
    %c0_76 = arith.constant 0 : index
    %c32_77 = arith.constant 32 : index
    %c224_78 = arith.constant 224 : index
    %136 = vector.load %arg3[%c0_76, %c32_77, %c224_78] : memref<2x64x256xf32, #tpu.memory_space<vmem>>, vector<1x32x16xf32>
    %137 = vector.shape_cast %136 : vector<1x32x16xf32> to vector<32x16xf32>
    %138 = vector.shape_cast %135 : vector<32x16xf32> to vector<1x32x16xf32>
    tpu.vector_store %arg3[%c0_76, %c32_77, %c224_78], %138 {strides = array<i32>} : memref<2x64x256xf32, #tpu.memory_space<vmem>>, vector<1x32x16xf32>,
    %c0_79 = arith.constant 0 : index
    %c0_80 = arith.constant 0 : index
    %c240 = arith.constant 240 : index
    %139 = vector.load %arg3[%c0_79, %c0_80, %c240] : memref<2x64x256xf32, #tpu.memory_space<vmem>>, vector<1x32x16xf32>
    %140 = vector.shape_cast %139 : vector<1x32x16xf32> to vector<32x16xf32>
    %141 = vector.shape_cast %1 : vector<32x16xf32> to vector<1x32x16xf32>
    tpu.vector_store %arg3[%c0_79, %c0_80, %c240], %141 {strides = array<i32>} : memref<2x64x256xf32, #tpu.memory_space<vmem>>, vector<1x32x16xf32>,
    %142 = vector.extract_strided_slice %3 {offsets = [0, 15], sizes = [32, 1], strides = [1, 1]} : vector<32x16xf32> to vector<32x1xf32>
    %143 = vector.shape_cast %142 : vector<32x1xf32> to vector<32x1xf32>
    %144 = vector.broadcast %143 : vector<32x1xf32> to vector<32x16xf32>
    %c0_81 = arith.constant 0 : index
    %c32_82 = arith.constant 32 : index
    %c240_83 = arith.constant 240 : index
    %145 = vector.load %arg3[%c0_81, %c32_82, %c240_83] : memref<2x64x256xf32, #tpu.memory_space<vmem>>, vector<1x32x16xf32>
    %146 = vector.shape_cast %145 : vector<1x32x16xf32> to vector<32x16xf32>
    %147 = vector.shape_cast %144 : vector<32x16xf32> to vector<1x32x16xf32>
    tpu.vector_store %arg3[%c0_81, %c32_82, %c240_83], %147 {strides = array<i32>} : memref<2x64x256xf32, #tpu.memory_space<vmem>>, vector<1x32x16xf32>,
    %c0_84 = arith.constant 0 : index
    %c0_85 = arith.constant 0 : index
    %c0_86 = arith.constant 0 : index
    %148 = vector.load %arg3[%c0_84, %c0_85, %c0_86] : memref<2x64x256xf32, #tpu.memory_space<vmem>>, vector<1x64x256xf32>
    %149 = vector.shape_cast %148 : vector<1x64x256xf32> to vector<64x256xf32>
    %c1 = arith.constant 1 : index
    %c0_87 = arith.constant 0 : index
    %c0_88 = arith.constant 0 : index
    %150 = vector.load %arg3[%c1, %c0_87, %c0_88] : memref<2x64x256xf32, #tpu.memory_space<vmem>>, vector<1x64x256xf32>
    %151 = vector.shape_cast %150 : vector<1x64x256xf32> to vector<64x256xf32>
    %152 = vector.shape_cast %149 : vector<64x256xf32> to vector<1x64x256xf32>
    tpu.vector_store %arg3[%c1, %c0_87, %c0_88], %152 {strides = array<i32>} : memref<2x64x256xf32, #tpu.memory_space<vmem>>, vector<1x64x256xf32>,
    return
  }
  func.func @transform_0(%arg0: i32) -> (i32, i32) {
    %c0_i32 = arith.constant 0 : i32
    %c0_i32_0 = arith.constant 0 : i32
    %c0_i32_1 = arith.constant 0 : i32
    return %c0_i32, %c0_i32_0 : i32, i32
  }
  func.func @transform_1(%arg0: i32) -> (i32, i32) {
    %c0_i32 = arith.constant 0 : i32
    %c0_i32_0 = arith.constant 0 : i32
    %c0_i32_1 = arith.constant 0 : i32
    return %c0_i32, %c0_i32_0 : i32, i32
  }
  func.func @transform_2(%arg0: i32) -> (i32, i32, i32) {
    %c0_i32 = arith.constant 0 : i32
    %c0_i32_0 = arith.constant 0 : i32
    %c0_i32_1 = arith.constant 0 : i32
    return %arg0, %c0_i32, %c0_i32_0 : i32, i32, i32
  }
}

</mosaic_0001>

<llo_original>
// kernel: tpu_custom_call.1
$region0: #{tpu_custom_call.1}
  #allocation0 [shape = 'u32[]', space=smem, size = 0x4, offset = 0x4, fixed_abs, tag = 'smem constant byte address 0x4 - core index']
  #allocation1 [shape = 'u32[144,128]{1,0:T(1,128)}', space=vmem, size = 0x12000, scoped, tag = 'internal scratch']
  %s0 = inlined_call_operand.vmem [shape: f32[50,32], index: 0, kind: input, shape index: {}]
  %s1 = inlined_call_operand.vmem [shape: f32[50,32], index: 1, kind: input, shape index: {}]
  %s2 = inlined_call_operand.hbm [shape: f32[2,64,256], index: 2, kind: output, shape index: {}]
  %s3 = sld [smem:[#allocation0]]
  $region18: #{tpu_custom_call.1} parent=0
    _
  %s5 = ssub.s32 1, %s3
  %s6 = scalar_select 0, %s5, %s3
  $region1: #{tpu_custom_call.1} parent=0
    #allocation2 [shape = 'u8[131072]{0}', space=vmem, size = 0x20000, scoped, tag = 'output window, operand 0, single buffered']
    #allocation3 [shape = 's32[1]{0}', space=sflag, size = 0x4, scoped, tag = 'scoped memory for tpu_custom_call.1']
    %7 = vsyncpa [#allocation3], 0
    // Predicated region
    $region2: #{tpu_custom_call.1} parent=1 // pred_check
      _
    $region3: #{tpu_custom_call.1} parent=1 // pred_check_branch
      %9 = sbr.rel (0) target = $region5
    $region4: #{tpu_custom_call.1} parent=1 // pred_region
      _
    $region5: #{tpu_custom_call.1} parent=1 // pred_fallthru
      _
    // Predicated region
    $region6: #{tpu_custom_call.1} parent=1 // pred_check
      _
    $region7: #{tpu_custom_call.1} parent=1 // pred_check_branch
      %11 = sbr.rel (0) target = $region9
    $region8: #{tpu_custom_call.1} parent=1 // pred_region
      _
    $region9: #{tpu_custom_call.1} parent=1 // pred_fallthru
      _
    %v12 = vld [vmem:[%s0] sm:$0xff]
    %v13 = vld [vmem:[%s0 + $0x8] sm:$0xff]
    %14 = vxpose.xlu0.b32.start [1/16] %v12, 128
    %15 = vxpose.xlu0.b32.cont [2/16] %v13, 128
    %16 = vxpose.xlu0.b32.cont [3/16] 0.0, 128
    %17 = vxpose.xlu0.b32.cont [4/16] 0.0, 128
    %18 = vxpose.xlu0.b32.cont [5/16] 0.0, 128
    %19 = vxpose.xlu0.b32.cont [6/16] 0.0, 128
    %20 = vxpose.xlu0.b32.cont [7/16] 0.0, 128
    %21 = vxpose.xlu0.b32.cont [8/16] 0.0, 128
    %22 = vxpose.xlu0.b32.cont [9/16] 0.0, 128
    %23 = vxpose.xlu0.b32.cont [10/16] 0.0, 128
    %24 = vxpose.xlu0.b32.cont [11/16] 0.0, 128
    %25 = vxpose.xlu0.b32.cont [12/16] 0.0, 128
    %26 = vxpose.xlu0.b32.cont [13/16] 0.0, 128
    %27 = vxpose.xlu0.b32.cont [14/16] 0.0, 128
    %28 = vxpose.xlu0.b32.cont [15/16] 0.0, 128
    %29 = vxpose.xlu0.b32.end [16/16] 0.0, 128
    %v30 = vpop.trf.xlu0
    %v31 = vpop.trf.xlu0
    %v32 = vpop.trf.xlu0
    %v33 = vpop.trf.xlu0
    %v34 = vpop.trf.xlu0
    %v35 = vpop.trf.xlu0
    %v36 = vpop.trf.xlu0
    %v37 = vpop.trf.xlu0
    %v38 = vpop.trf.xlu0
    %v39 = vpop.trf.xlu0
    %v40 = vpop.trf.xlu0
    %v41 = vpop.trf.xlu0
    %v42 = vpop.trf.xlu0
    %v43 = vpop.trf.xlu0
    %v44 = vpop.trf.xlu0
    %v45 = vpop.trf.xlu0
    %v46 = vld [vmem:[%s1] sm:$0xff]
    %v47 = vld [vmem:[%s1 + $0x8] sm:$0xff]
    %48 = vxpose.xlu0.b32.start [1/16] %v46, 128
    %49 = vxpose.xlu0.b32.cont [2/16] %v47, 128
    %50 = vxpose.xlu0.b32.cont [3/16] 0.0, 128
    %51 = vxpose.xlu0.b32.cont [4/16] 0.0, 128
    %52 = vxpose.xlu0.b32.cont [5/16] 0.0, 128
    %53 = vxpose.xlu0.b32.cont [6/16] 0.0, 128
    %54 = vxpose.xlu0.b32.cont [7/16] 0.0, 128
    %55 = vxpose.xlu0.b32.cont [8/16] 0.0, 128
    %56 = vxpose.xlu0.b32.cont [9/16] 0.0, 128
    %57 = vxpose.xlu0.b32.cont [10/16] 0.0, 128
    %58 = vxpose.xlu0.b32.cont [11/16] 0.0, 128
    %59 = vxpose.xlu0.b32.cont [12/16] 0.0, 128
    %60 = vxpose.xlu0.b32.cont [13/16] 0.0, 128
    %61 = vxpose.xlu0.b32.cont [14/16] 0.0, 128
    %62 = vxpose.xlu0.b32.cont [15/16] 0.0, 128
    %63 = vxpose.xlu0.b32.end [16/16] 0.0, 128
    %v64 = vpop.trf.xlu0
    %v65 = vpop.trf.xlu0
    %v66 = vpop.trf.xlu0
    %v67 = vpop.trf.xlu0
    %v68 = vpop.trf.xlu0
    %v69 = vpop.trf.xlu0
    %v70 = vpop.trf.xlu0
    %v71 = vpop.trf.xlu0
    %v72 = vpop.trf.xlu0
    %v73 = vpop.trf.xlu0
    %v74 = vpop.trf.xlu0
    %v75 = vpop.trf.xlu0
    %v76 = vpop.trf.xlu0
    %v77 = vpop.trf.xlu0
    %v78 = vpop.trf.xlu0
    %v79 = vpop.trf.xlu0
    %vm80 = vcmask 130048
    %81 = vst.msk [vmem:[#allocation2] sm:$0xff] %vm80, %v30
    %82 = vst.msk [vmem:[#allocation2 + $0x10] sm:$0xff] %vm80, %v31
    %83 = vst.msk [vmem:[#allocation2 + $0x20] sm:$0xff] %vm80, %v32
    %84 = vst.msk [vmem:[#allocation2 + $0x30] sm:$0xff] %vm80, %v33
    %86 = vset.pattern.permute.xlu0 0
    %87 = vperm.xlu0 %86, %v64
    %v88 = vpop.permute.xlu0 %87
    %91 = vset.pattern.permute.xlu0 0
    %92 = vperm.xlu0 %91, %v65
    %v93 = vpop.permute.xlu0 %92
    %96 = vset.pattern.permute.xlu0 0
    %97 = vperm.xlu0 %96, %v66
    %v98 = vpop.permute.xlu0 %97
    %101 = vset.pattern.permute.xlu0 0
    %102 = vperm.xlu0 %101, %v67
    %v103 = vpop.permute.xlu0 %102
    %105 = vst.msk [vmem:[#allocation2 + $0x40] sm:$0xff] %vm80, %v88
    %106 = vst.msk [vmem:[#allocation2 + $0x50] sm:$0xff] %vm80, %v93
    %107 = vst.msk [vmem:[#allocation2 + $0x60] sm:$0xff] %vm80, %v98
    %108 = vst.msk [vmem:[#allocation2 + $0x70] sm:$0xff] %vm80, %v103
    %113 = vrot.lane.b32.xlu0 %v30, 16
    %v114 = vpop.permute.xlu0 %113
    %115 = vrot.lane.b32.xlu0 %v31, 16
    %v116 = vpop.permute.xlu0 %115
    %117 = vrot.lane.b32.xlu0 %v32, 16
    %v118 = vpop.permute.xlu0 %117
    %119 = vrot.lane.b32.xlu0 %v33, 16
    %v120 = vpop.permute.xlu0 %119
    %vm125 = vcmask 261248
    %126 = vst.msk [vmem:[#allocation2] sm:$0xff] %vm125, %v114
    %127 = vst.msk [vmem:[#allocation2 + $0x10] sm:$0xff] %vm125, %v116
    %128 = vst.msk [vmem:[#allocation2 + $0x20] sm:$0xff] %vm125, %v118
    %129 = vst.msk [vmem:[#allocation2 + $0x30] sm:$0xff] %vm125, %v120
    %130 = vset.pattern.permute.xlu0 1
    %131 = vperm.xlu0 %130, %v64
    %v132 = vpop.permute.xlu0 %131
    %134 = vset.pattern.permute.xlu0 1
    %135 = vperm.xlu0 %134, %v65
    %v136 = vpop.permute.xlu0 %135
    %138 = vset.pattern.permute.xlu0 1
    %139 = vperm.xlu0 %138, %v66
    %v140 = vpop.permute.xlu0 %139
    %142 = vset.pattern.permute.xlu0 1
    %143 = vperm.xlu0 %142, %v67
    %v144 = vpop.permute.xlu0 %143
    %146 = vst.msk [vmem:[#allocation2 + $0x40] sm:$0xff] %vm125, %v132
    %147 = vst.msk [vmem:[#allocation2 + $0x50] sm:$0xff] %vm125, %v136
    %148 = vst.msk [vmem:[#allocation2 + $0x60] sm:$0xff] %vm125, %v140
    %149 = vst.msk [vmem:[#allocation2 + $0x70] sm:$0xff] %vm125, %v144
    %150 = vrot.lane.b32.xlu0 %v30, 32
    %v151 = vpop.permute.xlu0 %150
    %152 = vrot.lane.b32.xlu0 %v31, 32
    %v153 = vpop.permute.xlu0 %152
    %154 = vrot.lane.b32.xlu0 %v32, 32
    %v155 = vpop.permute.xlu0 %154
    %156 = vrot.lane.b32.xlu0 %v33, 32
    %v157 = vpop.permute.xlu0 %156
    %vm162 = vcmask 392448
    %163 = vst.msk [vmem:[#allocation2] sm:$0xff] %vm162, %v151
    %164 = vst.msk [vmem:[#allocation2 + $0x10] sm:$0xff] %vm162, %v153
    %165 = vst.msk [vmem:[#allocation2 + $0x20] sm:$0xff] %vm162, %v155
    %166 = vst.msk [vmem:[#allocation2 + $0x30] sm:$0xff] %vm162, %v157
    %167 = vset.pattern.permute.xlu0 2
    %168 = vperm.xlu0 %167, %v64
    %v169 = vpop.permute.xlu0 %168
    %171 = vset.pattern.permute.xlu0 2
    %172 = vperm.xlu0 %171, %v65
    %v173 = vpop.permute.xlu0 %172
    %175 = vset.pattern.permute.xlu0 2
    %176 = vperm.xlu0 %175, %v66
    %v177 = vpop.permute.xlu0 %176
    %179 = vset.pattern.permute.xlu0 2
    %180 = vperm.xlu0 %179, %v67
    %v181 = vpop.permute.xlu0 %180
    %183 = vst.msk [vmem:[#allocation2 + $0x40] sm:$0xff] %vm162, %v169
    %184 = vst.msk [vmem:[#allocation2 + $0x50] sm:$0xff] %vm162, %v173
    %185 = vst.msk [vmem:[#allocation2 + $0x60] sm:$0xff] %vm162, %v177
    %186 = vst.msk [vmem:[#allocation2 + $0x70] sm:$0xff] %vm162, %v181
    %187 = vrot.lane.b32.xlu0 %v30, 48
    %v188 = vpop.permute.xlu0 %187
    %189 = vrot.lane.b32.xlu0 %v31, 48
    %v190 = vpop.permute.xlu0 %189
    %191 = vrot.lane.b32.xlu0 %v32, 48
    %v192 = vpop.permute.xlu0 %191
    %193 = vrot.lane.b32.xlu0 %v33, 48
    %v194 = vpop.permute.xlu0 %193
    %vm199 = vcmask 523648
    %200 = vst.msk [vmem:[#allocation2] sm:$0xff] %vm199, %v188
    %201 = vst.msk [vmem:[#allocation2 + $0x10] sm:$0xff] %vm199, %v190
    %202 = vst.msk [vmem:[#allocation2 + $0x20] sm:$0xff] %vm199, %v192
    %203 = vst.msk [vmem:[#allocation2 + $0x30] sm:$0xff] %vm199, %v194
    %204 = vset.pattern.permute.xlu0 3
    %205 = vperm.xlu0 %204, %v64
    %v206 = vpop.permute.xlu0 %205
    %208 = vset.pattern.permute.xlu0 3
    %209 = vperm.xlu0 %208, %v65
    %v210 = vpop.permute.xlu0 %209
    %212 = vset.pattern.permute.xlu0 3
    %213 = vperm.xlu0 %212, %v66
    %v214 = vpop.permute.xlu0 %213
    %216 = vset.pattern.permute.xlu0 3
    %217 = vperm.xlu0 %216, %v67
    %v218 = vpop.permute.xlu0 %217
    %220 = vst.msk [vmem:[#allocation2 + $0x40] sm:$0xff] %vm199, %v206
    %221 = vst.msk [vmem:[#allocation2 + $0x50] sm:$0xff] %vm199, %v210
    %222 = vst.msk [vmem:[#allocation2 + $0x60] sm:$0xff] %vm199, %v214
    %223 = vst.msk [vmem:[#allocation2 + $0x70] sm:$0xff] %vm199, %v218
    %224 = vrot.lane.b32.xlu0 %v30, 64
    %v225 = vpop.permute.xlu0 %224
    %226 = vrot.lane.b32.xlu0 %v31, 64
    %v227 = vpop.permute.xlu0 %226
    %228 = vrot.lane.b32.xlu0 %v32, 64
    %v229 = vpop.permute.xlu0 %228
    %230 = vrot.lane.b32.xlu0 %v33, 64
    %v231 = vpop.permute.xlu0 %230
    %vm236 = vcmask 654848
    %237 = vst.msk [vmem:[#allocation2] sm:$0xff] %vm236, %v225
    %238 = vst.msk [vmem:[#allocation2 + $0x10] sm:$0xff] %vm236, %v227
    %239 = vst.msk [vmem:[#allocation2 + $0x20] sm:$0xff] %vm236, %v229
    %240 = vst.msk [vmem:[#allocation2 + $0x30] sm:$0xff] %vm236, %v231
    %241 = vset.pattern.permute.xlu0 4
    %242 = vperm.xlu0 %241, %v64
    %v243 = vpop.permute.xlu0 %242
    %245 = vset.pattern.permute.xlu0 4
    %246 = vperm.xlu0 %245, %v65
    %v247 = vpop.permute.xlu0 %246
    %249 = vset.pattern.permute.xlu0 4
    %250 = vperm.xlu0 %249, %v66
    %v251 = vpop.permute.xlu0 %250
    %253 = vset.pattern.permute.xlu0 4
    %254 = vperm.xlu0 %253, %v67
    %v255 = vpop.permute.xlu0 %254
    %257 = vst.msk [vmem:[#allocation2 + $0x40] sm:$0xff] %vm236, %v243
    %258 = vst.msk [vmem:[#allocation2 + $0x50] sm:$0xff] %vm236, %v247
    %259 = vst.msk [vmem:[#allocation2 + $0x60] sm:$0xff] %vm236, %v251
    %260 = vst.msk [vmem:[#allocation2 + $0x70] sm:$0xff] %vm236, %v255
    %261 = vrot.lane.b32.xlu0 %v30, 80
    %v262 = vpop.permute.xlu0 %261
    %263 = vrot.lane.b32.xlu0 %v31, 80
    %v264 = vpop.permute.xlu0 %263
    %265 = vrot.lane.b32.xlu0 %v32, 80
    %v266 = vpop.permute.xlu0 %265
    %267 = vrot.lane.b32.xlu0 %v33, 80
    %v268 = vpop.permute.xlu0 %267
    %vm273 = vcmask 786048
    %274 = vst.msk [vmem:[#allocation2] sm:$0xff] %vm273, %v262
    %275 = vst.msk [vmem:[#allocation2 + $0x10] sm:$0xff] %vm273, %v264
    %276 = vst.msk [vmem:[#allocation2 + $0x20] sm:$0xff] %vm273, %v266
    %277 = vst.msk [vmem:[#allocation2 + $0x30] sm:$0xff] %vm273, %v268
    %278 = vset.pattern.permute.xlu0 5
    %279 = vperm.xlu0 %278, %v64
    %v280 = vpop.permute.xlu0 %279
    %282 = vset.pattern.permute.xlu0 5
    %283 = vperm.xlu0 %282, %v65
    %v284 = vpop.permute.xlu0 %283
    %286 = vset.pattern.permute.xlu0 5
    %287 = vperm.xlu0 %286, %v66
    %v288 = vpop.permute.xlu0 %287
    %290 = vset.pattern.permute.xlu0 5
    %291 = vperm.xlu0 %290, %v67
    %v292 = vpop.permute.xlu0 %291
    %294 = vst.msk [vmem:[#allocation2 + $0x40] sm:$0xff] %vm273, %v280
    %295 = vst.msk [vmem:[#allocation2 + $0x50] sm:$0xff] %vm273, %v284
    %296 = vst.msk [vmem:[#allocation2 + $0x60] sm:$0xff] %vm273, %v288
    %297 = vst.msk [vmem:[#allocation2 + $0x70] sm:$0xff] %vm273, %v292
    %298 = vrot.lane.b32.xlu0 %v30, 96
    %v299 = vpop.permute.xlu0 %298
    %300 = vrot.lane.b32.xlu0 %v31, 96
    %v301 = vpop.permute.xlu0 %300
    %302 = vrot.lane.b32.xlu0 %v32, 96
    %v303 = vpop.permute.xlu0 %302
    %304 = vrot.lane.b32.xlu0 %v33, 96
    %v305 = vpop.permute.xlu0 %304
    %vm310 = vcmask 917248
    %311 = vst.msk [vmem:[#allocation2] sm:$0xff] %vm310, %v299
    %312 = vst.msk [vmem:[#allocation2 + $0x10] sm:$0xff] %vm310, %v301
    %313 = vst.msk [vmem:[#allocation2 + $0x20] sm:$0xff] %vm310, %v303
    %314 = vst.msk [vmem:[#allocation2 + $0x30] sm:$0xff] %vm310, %v305
    %315 = vset.pattern.permute.xlu0 6
    %316 = vperm.xlu0 %315, %v64
    %v317 = vpop.permute.xlu0 %316
    %319 = vset.pattern.permute.xlu0 6
    %320 = vperm.xlu0 %319, %v65
    %v321 = vpop.permute.xlu0 %320
    %323 = vset.pattern.permute.xlu0 6
    %324 = vperm.xlu0 %323, %v66
    %v325 = vpop.permute.xlu0 %324
    %327 = vset.pattern.permute.xlu0 6
    %328 = vperm.xlu0 %327, %v67
    %v329 = vpop.permute.xlu0 %328
    %331 = vst.msk [vmem:[#allocation2 + $0x40] sm:$0xff] %vm310, %v317
    %332 = vst.msk [vmem:[#allocation2 + $0x50] sm:$0xff] %vm310, %v321
    %333 = vst.msk [vmem:[#allocation2 + $0x60] sm:$0xff] %vm310, %v325
    %334 = vst.msk [vmem:[#allocation2 + $0x70] sm:$0xff] %vm310, %v329
    %335 = vrot.lane.b32.xlu0 %v30, 112
    %v336 = vpop.permute.xlu0 %335
    %337 = vrot.lane.b32.xlu0 %v31, 112
    %v338 = vpop.permute.xlu0 %337
    %339 = vrot.lane.b32.xlu0 %v32, 112
    %v340 = vpop.permute.xlu0 %339
    %341 = vrot.lane.b32.xlu0 %v33, 112
    %v342 = vpop.permute.xlu0 %341
    %vm347 = vcmask 1048448
    %348 = vst.msk [vmem:[#allocation2] sm:$0xff] %vm347, %v336
    %349 = vst.msk [vmem:[#allocation2 + $0x10] sm:$0xff] %vm347, %v338
    %350 = vst.msk [vmem:[#allocation2 + $0x20] sm:$0xff] %vm347, %v340
    %351 = vst.msk [vmem:[#allocation2 + $0x30] sm:$0xff] %vm347, %v342
    %352 = vset.pattern.permute.xlu0 7
    %353 = vperm.xlu0 %352, %v64
    %v354 = vpop.permute.xlu0 %353
    %356 = vset.pattern.permute.xlu0 7
    %357 = vperm.xlu0 %356, %v65
    %v358 = vpop.permute.xlu0 %357
    %360 = vset.pattern.permute.xlu0 7
    %361 = vperm.xlu0 %360, %v66
    %v362 = vpop.permute.xlu0 %361
    %364 = vset.pattern.permute.xlu0 7
    %365 = vperm.xlu0 %364, %v67
    %v366 = vpop.permute.xlu0 %365
    %368 = vst.msk [vmem:[#allocation2 + $0x40] sm:$0xff] %vm347, %v354
    %369 = vst.msk [vmem:[#allocation2 + $0x50] sm:$0xff] %vm347, %v358
    %370 = vst.msk [vmem:[#allocation2 + $0x60] sm:$0xff] %vm347, %v362
    %371 = vst.msk [vmem:[#allocation2 + $0x70] sm:$0xff] %vm347, %v366
    %372 = vst.msk [vmem:[#allocation2 + $0x8] sm:$0xff] %vm80, %v30
    %373 = vst.msk [vmem:[#allocation2 + $0x18] sm:$0xff] %vm80, %v31
    %374 = vst.msk [vmem:[#allocation2 + $0x28] sm:$0xff] %vm80, %v32
    %375 = vst.msk [vmem:[#allocation2 + $0x38] sm:$0xff] %vm80, %v33
    %376 = vset.pattern.permute.xlu0 8
    %377 = vperm.xlu0 %376, %v64
    %v378 = vpop.permute.xlu0 %377
    %380 = vset.pattern.permute.xlu0 8
    %381 = vperm.xlu0 %380, %v65
    %v382 = vpop.permute.xlu0 %381
    %384 = vset.pattern.permute.xlu0 8
    %385 = vperm.xlu0 %384, %v66
    %v386 = vpop.permute.xlu0 %385
    %388 = vset.pattern.permute.xlu0 8
    %389 = vperm.xlu0 %388, %v67
    %v390 = vpop.permute.xlu0 %389
    %392 = vst.msk [vmem:[#allocation2 + $0x48] sm:$0xff] %vm80, %v378
    %393 = vst.msk [vmem:[#allocation2 + $0x58] sm:$0xff] %vm80, %v382
    %394 = vst.msk [vmem:[#allocation2 + $0x68] sm:$0xff] %vm80, %v386
    %395 = vst.msk [vmem:[#allocation2 + $0x78] sm:$0xff] %vm80, %v390
    %396 = vst.msk [vmem:[#allocation2 + $0x8] sm:$0xff] %vm125, %v114
    %397 = vst.msk [vmem:[#allocation2 + $0x18] sm:$0xff] %vm125, %v116
    %398 = vst.msk [vmem:[#allocation2 + $0x28] sm:$0xff] %vm125, %v118
    %399 = vst.msk [vmem:[#allocation2 + $0x38] sm:$0xff] %vm125, %v120
    %400 = vset.pattern.permute.xlu0 9
    %401 = vperm.xlu0 %400, %v64
    %v402 = vpop.permute.xlu0 %401
    %404 = vset.pattern.permute.xlu0 9
    %405 = vperm.xlu0 %404, %v65
    %v406 = vpop.permute.xlu0 %405
    %408 = vset.pattern.permute.xlu0 9
    %409 = vperm.xlu0 %408, %v66
    %v410 = vpop.permute.xlu0 %409
    %412 = vset.pattern.permute.xlu0 9
    %413 = vperm.xlu0 %412, %v67
    %v414 = vpop.permute.xlu0 %413
    %416 = vst.msk [vmem:[#allocation2 + $0x48] sm:$0xff] %vm125, %v402
    %417 = vst.msk [vmem:[#allocation2 + $0x58] sm:$0xff] %vm125, %v406
    %418 = vst.msk [vmem:[#allocation2 + $0x68] sm:$0xff] %vm125, %v410
    %419 = vst.msk [vmem:[#allocation2 + $0x78] sm:$0xff] %vm125, %v414
    %420 = vst.msk [vmem:[#allocation2 + $0x8] sm:$0xff] %vm162, %v151
    %421 = vst.msk [vmem:[#allocation2 + $0x18] sm:$0xff] %vm162, %v153
    %422 = vst.msk [vmem:[#allocation2 + $0x28] sm:$0xff] %vm162, %v155
    %423 = vst.msk [vmem:[#allocation2 + $0x38] sm:$0xff] %vm162, %v157
    %424 = vset.pattern.permute.xlu0 10
    %425 = vperm.xlu0 %424, %v64
    %v426 = vpop.permute.xlu0 %425
    %428 = vset.pattern.permute.xlu0 10
    %429 = vperm.xlu0 %428, %v65
    %v430 = vpop.permute.xlu0 %429
    %432 = vset.pattern.permute.xlu0 10
    %433 = vperm.xlu0 %432, %v66
    %v434 = vpop.permute.xlu0 %433
    %436 = vset.pattern.permute.xlu0 10
    %437 = vperm.xlu0 %436, %v67
    %v438 = vpop.permute.xlu0 %437
    %440 = vst.msk [vmem:[#allocation2 + $0x48] sm:$0xff] %vm162, %v426
    %441 = vst.msk [vmem:[#allocation2 + $0x58] sm:$0xff] %vm162, %v430
    %442 = vst.msk [vmem:[#allocation2 + $0x68] sm:$0xff] %vm162, %v434
    %443 = vst.msk [vmem:[#allocation2 + $0x78] sm:$0xff] %vm162, %v438
    %444 = vst.msk [vmem:[#allocation2 + $0x8] sm:$0xff] %vm199, %v188
    %445 = vst.msk [vmem:[#allocation2 + $0x18] sm:$0xff] %vm199, %v190
    %446 = vst.msk [vmem:[#allocation2 + $0x28] sm:$0xff] %vm199, %v192
    %447 = vst.msk [vmem:[#allocation2 + $0x38] sm:$0xff] %vm199, %v194
    %448 = vset.pattern.permute.xlu0 11
    %449 = vperm.xlu0 %448, %v64
    %v450 = vpop.permute.xlu0 %449
    %452 = vset.pattern.permute.xlu0 11
    %453 = vperm.xlu0 %452, %v65
    %v454 = vpop.permute.xlu0 %453
    %456 = vset.pattern.permute.xlu0 11
    %457 = vperm.xlu0 %456, %v66
    %v458 = vpop.permute.xlu0 %457
    %460 = vset.pattern.permute.xlu0 11
    %461 = vperm.xlu0 %460, %v67
    %v462 = vpop.permute.xlu0 %461
    %464 = vst.msk [vmem:[#allocation2 + $0x48] sm:$0xff] %vm199, %v450
    %465 = vst.msk [vmem:[#allocation2 + $0x58] sm:$0xff] %vm199, %v454
    %466 = vst.msk [vmem:[#allocation2 + $0x68] sm:$0xff] %vm199, %v458
    %467 = vst.msk [vmem:[#allocation2 + $0x78] sm:$0xff] %vm199, %v462
    %468 = vst.msk [vmem:[#allocation2 + $0x8] sm:$0xff] %vm236, %v225
    %469 = vst.msk [vmem:[#allocation2 + $0x18] sm:$0xff] %vm236, %v227
    %470 = vst.msk [vmem:[#allocation2 + $0x28] sm:$0xff] %vm236, %v229
    %471 = vst.msk [vmem:[#allocation2 + $0x38] sm:$0xff] %vm236, %v231
    %472 = vset.pattern.permute.xlu0 12
    %473 = vperm.xlu0 %472, %v64
    %v474 = vpop.permute.xlu0 %473
    %476 = vset.pattern.permute.xlu0 12
    %477 = vperm.xlu0 %476, %v65
    %v478 = vpop.permute.xlu0 %477
    %480 = vset.pattern.permute.xlu0 12
    %481 = vperm.xlu0 %480, %v66
    %v482 = vpop.permute.xlu0 %481
    %484 = vset.pattern.permute.xlu0 12
    %485 = vperm.xlu0 %484, %v67
    %v486 = vpop.permute.xlu0 %485
    %488 = vst.msk [vmem:[#allocation2 + $0x48] sm:$0xff] %vm236, %v474
    %489 = vst.msk [vmem:[#allocation2 + $0x58] sm:$0xff] %vm236, %v478
    %490 = vst.msk [vmem:[#allocation2 + $0x68] sm:$0xff] %vm236, %v482
    %491 = vst.msk [vmem:[#allocation2 + $0x78] sm:$0xff] %vm236, %v486
    %492 = vst.msk [vmem:[#allocation2 + $0x8] sm:$0xff] %vm273, %v262
    %493 = vst.msk [vmem:[#allocation2 + $0x18] sm:$0xff] %vm273, %v264
    %494 = vst.msk [vmem:[#allocation2 + $0x28] sm:$0xff] %vm273, %v266
    %495 = vst.msk [vmem:[#allocation2 + $0x38] sm:$0xff] %vm273, %v268
    %496 = vset.pattern.permute.xlu0 13
    %497 = vperm.xlu0 %496, %v64
    %v498 = vpop.permute.xlu0 %497
    %500 = vset.pattern.permute.xlu0 13
    %501 = vperm.xlu0 %500, %v65
    %v502 = vpop.permute.xlu0 %501
    %504 = vset.pattern.permute.xlu0 13
    %505 = vperm.xlu0 %504, %v66
    %v506 = vpop.permute.xlu0 %505
    %508 = vset.pattern.permute.xlu0 13
    %509 = vperm.xlu0 %508, %v67
    %v510 = vpop.permute.xlu0 %509
    %512 = vst.msk [vmem:[#allocation2 + $0x48] sm:$0xff] %vm273, %v498
    %513 = vst.msk [vmem:[#allocation2 + $0x58] sm:$0xff] %vm273, %v502
    %514 = vst.msk [vmem:[#allocation2 + $0x68] sm:$0xff] %vm273, %v506
    %515 = vst.msk [vmem:[#allocation2 + $0x78] sm:$0xff] %vm273, %v510
    %516 = vst.msk [vmem:[#allocation2 + $0x8] sm:$0xff] %vm310, %v299
    %517 = vst.msk [vmem:[#allocation2 + $0x18] sm:$0xff] %vm310, %v301
    %518 = vst.msk [vmem:[#allocation2 + $0x28] sm:$0xff] %vm310, %v303
    %519 = vst.msk [vmem:[#allocation2 + $0x38] sm:$0xff] %vm310, %v305
    %520 = vset.pattern.permute.xlu0 14
    %521 = vperm.xlu0 %520, %v64
    %v522 = vpop.permute.xlu0 %521
    %524 = vset.pattern.permute.xlu0 14
    %525 = vperm.xlu0 %524, %v65
    %v526 = vpop.permute.xlu0 %525
    %528 = vset.pattern.permute.xlu0 14
    %529 = vperm.xlu0 %528, %v66
    %v530 = vpop.permute.xlu0 %529
    %532 = vset.pattern.permute.xlu0 14
    %533 = vperm.xlu0 %532, %v67
    %v534 = vpop.permute.xlu0 %533
    %536 = vst.msk [vmem:[#allocation2 + $0x48] sm:$0xff] %vm310, %v522
    %537 = vst.msk [vmem:[#allocation2 + $0x58] sm:$0xff] %vm310, %v526
    %538 = vst.msk [vmem:[#allocation2 + $0x68] sm:$0xff] %vm310, %v530
    %539 = vst.msk [vmem:[#allocation2 + $0x78] sm:$0xff] %vm310, %v534
    %540 = vst.msk [vmem:[#allocation2 + $0x8] sm:$0xff] %vm347, %v336
    %541 = vst.msk [vmem:[#allocation2 + $0x18] sm:$0xff] %vm347, %v338
    %542 = vst.msk [vmem:[#allocation2 + $0x28] sm:$0xff] %vm347, %v340
    %543 = vst.msk [vmem:[#allocation2 + $0x38] sm:$0xff] %vm347, %v342
    %544 = vset.pattern.permute.xlu0 15
    %545 = vperm.xlu0 %544, %v64
    %v546 = vpop.permute.xlu0 %545
    %548 = vset.pattern.permute.xlu0 15
    %549 = vperm.xlu0 %548, %v65
    %v550 = vpop.permute.xlu0 %549
    %552 = vset.pattern.permute.xlu0 15
    %553 = vperm.xlu0 %552, %v66
    %v554 = vpop.permute.xlu0 %553
    %556 = vset.pattern.permute.xlu0 15
    %557 = vperm.xlu0 %556, %v67
    %v558 = vpop.permute.xlu0 %557
    %560 = vst.msk [vmem:[#allocation2 + $0x48] sm:$0xff] %vm347, %v546
    %561 = vst.msk [vmem:[#allocation2 + $0x58] sm:$0xff] %vm347, %v550
    %562 = vst.msk [vmem:[#allocation2 + $0x68] sm:$0xff] %vm347, %v554
    %563 = vst.msk [vmem:[#allocation2 + $0x78] sm:$0xff] %vm347, %v558
    %v564 = vld [vmem:[#allocation2] sm:$0xff]
    %v565 = vld [vmem:[#allocation2 + $0x8] sm:$0xff]
    %v566 = vld [vmem:[#allocation2 + $0x10] sm:$0xff]
    %v567 = vld [vmem:[#allocation2 + $0x18] sm:$0xff]
    %v568 = vld [vmem:[#allocation2 + $0x20] sm:$0xff]
    %v569 = vld [vmem:[#allocation2 + $0x28] sm:$0xff]
    %v570 = vld [vmem:[#allocation2 + $0x30] sm:$0xff]
    %v571 = vld [vmem:[#allocation2 + $0x38] sm:$0xff]
    %v572 = vld [vmem:[#allocation2 + $0x40] sm:$0xff]
    %v573 = vld [vmem:[#allocation2 + $0x48] sm:$0xff]
    %v574 = vld [vmem:[#allocation2 + $0x50] sm:$0xff]
    %v575 = vld [vmem:[#allocation2 + $0x58] sm:$0xff]
    %v576 = vld [vmem:[#allocation2 + $0x60] sm:$0xff]
    %v577 = vld [vmem:[#allocation2 + $0x68] sm:$0xff]
    %v578 = vld [vmem:[#allocation2 + $0x70] sm:$0xff]
    %v579 = vld [vmem:[#allocation2 + $0x78] sm:$0xff]
    %s580 = scalar_lea.vmem [#allocation2], 128
    %581 = vst [vmem:[%s580] sm:$0xff] %v564
    %582 = vst [vmem:[%s580 + $0x8] sm:$0xff] %v565
    %583 = vst [vmem:[%s580 + $0x10] sm:$0xff] %v566
    %584 = vst [vmem:[%s580 + $0x18] sm:$0xff] %v567
    %585 = vst [vmem:[%s580 + $0x20] sm:$0xff] %v568
    %586 = vst [vmem:[%s580 + $0x28] sm:$0xff] %v569
    %587 = vst [vmem:[%s580 + $0x30] sm:$0xff] %v570
    %588 = vst [vmem:[%s580 + $0x38] sm:$0xff] %v571
    %589 = vst [vmem:[%s580 + $0x40] sm:$0xff] %v572
    %590 = vst [vmem:[%s580 + $0x48] sm:$0xff] %v573
    %591 = vst [vmem:[%s580 + $0x50] sm:$0xff] %v574
    %592 = vst [vmem:[%s580 + $0x58] sm:$0xff] %v575
    %593 = vst [vmem:[%s580 + $0x60] sm:$0xff] %v576
    %594 = vst [vmem:[%s580 + $0x68] sm:$0xff] %v577
    %595 = vst [vmem:[%s580 + $0x70] sm:$0xff] %v578
    %596 = vst [vmem:[%s580 + $0x78] sm:$0xff] %v579
    // Predicated region
    $region10: #{tpu_custom_call.1} parent=1 // pred_check
      _
    $region11: #{tpu_custom_call.1} parent=1 // pred_check_branch
      %598 = sbr.rel (0) target = $region13
    $region12: #{tpu_custom_call.1} parent=1 // pred_region
      %s600 = ssub.s32 4096, 4096
      %601 = vsyncadd [#allocation3], %s600
      %s602 = sshll.u32 [#allocation2], 4
      %s603 = int_to_ptr.vmem [resolvable:$true] %s602
      %608 = dma.vmem_to_hbm [thread:$0]  %s603, 4096, %s2, [#allocation3], 256, 256, 16
    $region13: #{tpu_custom_call.1} parent=1 // pred_fallthru
      _
    // Predicated region
    $region14: #{tpu_custom_call.1} parent=1 // pred_check
      _
    $region15: #{tpu_custom_call.1} parent=1 // pred_check_branch
      %610 = sbr.rel (0) target = $region17
    $region16: #{tpu_custom_call.1} parent=1 // pred_region
      %611 = dma.done [#allocation3], 4096
    $region17: #{tpu_custom_call.1} parent=1 // pred_fallthru
      _
    %612 = vsyncpa [#allocation3], 1

</llo_original>
